<compile_context>
chip_gen: v7x
topology: tpu7x:2x2x1
jax: 0.10.0
libtpu: 0.0.40
codegen_flags: <defaults>
</compile_context>

<pallas_src>
import functools

import jax
import jax.numpy as jnp
from jax.experimental import pallas as pl
from jax.experimental.pallas import tpu as pltpu

LANE = 128            # vreg lane width
SUBLANE_BF16 = 16     # bf16 sublane packing (batch tile granularity)
MAX_TILE_B = 512      # tall-M tile to amortize MXU fill/drain; well under VMEM limits


def _round_up(n, m):
    return ((n + m - 1) // m) * m


# ----------------------------------------------------------------------------
# One-time parameter preparation (hoisted out of the per-call hot path)
# ----------------------------------------------------------------------------
def prepare_params(params):
    """Pad weights/biases to lane-dense shapes once.

    params: list of {'w': (in, out) f32, 'b': (out,) f32}
    Returns: list of (w_padded bf16, b_padded (1, out_p) f32)
      * layer 0 weight keeps its true in-dim (input is NOT lane-padded)
      * all out-dims (and in-dims of later layers) are padded to 128 lanes
    """
    prepared = []
    for i, p in enumerate(params):
        w = jnp.asarray(p["w"], jnp.float32)
        b = jnp.asarray(p["b"], jnp.float32)
        k, n = w.shape
        kp = k if i == 0 else _round_up(k, LANE)
        np_ = _round_up(n, LANE)
        wp = jnp.zeros((kp, np_), jnp.float32).at[:k, :n].set(w).astype(jnp.bfloat16)
        bp = jnp.zeros((1, np_), jnp.float32).at[:, :n].set(b)
        prepared.append((wp, bp))
    return prepared


# ----------------------------------------------------------------------------
# Fused MLP kernel (all weights + one batch tile resident in VMEM)
# ----------------------------------------------------------------------------
def _make_mlp_kernel(num_layers):
    """Kernel signature: (x_ref, w0, b0, w1, b1, ..., out_ref)."""

    def kernel(x_ref, *refs):
        out_ref = refs[-1]
        wb = refs[:-1]
        h = x_ref[...]                                    # (TILE_B, in_size) f32
        for i in range(num_layers):
            w = wb[2 * i][...]                            # bf16 (Kp, Np)
            b = wb[2 * i + 1][...]                        # f32  (1, Np)
            # bf16 MXU matmul with f32 accumulation; bias add / ReLU stay f32.
            h = jnp.dot(h.astype(w.dtype), w,
                        preferred_element_type=jnp.float32) + b
            if i < num_layers - 1:
                h = jnp.maximum(h, 0.0)
        out_ref[...] = h                                  # lane-dense f32 store

    return kernel


# ----------------------------------------------------------------------------
# Forward: batch-tiled, megacore-parallel, single pallas_call
# ----------------------------------------------------------------------------
def modnet_classifier_forward(padded_params, x, *, out_size):
    orig_shape = x.shape
    in_size = orig_shape[-1]
    x2d = x.reshape(-1, in_size).astype(jnp.float32)
    B = x2d.shape[0]

    num_layers = len(padded_params)
    out_pad = padded_params[-1][0].shape[1]               # lane-padded last dim

    # Tall-M batch tile (>=16 for bf16 sublane packing, capped for VMEM headroom).
    tile_b = min(MAX_TILE_B, _round_up(B, SUBLANE_BF16))
    Bp = _round_up(B, tile_b)
    if Bp != B:
        # Only the (narrow, unpadded-feature-width) batch dim gets padded; skipped
        # entirely when the batch already divides the tile.
        x2d = jnp.pad(x2d, ((0, Bp - B), (0, 0)))

    grid = (Bp // tile_b,)

    in_specs = [pl.BlockSpec((tile_b, in_size), lambda i: (i, 0))]
    flat_wb = []
    for (w, b) in padded_params:
        in_specs.append(pl.BlockSpec(w.shape, lambda i: (0, 0)))   # weights: resident
        in_specs.append(pl.BlockSpec(b.shape, lambda i: (0, 0)))
        flat_wb += [w, b]
    out_spec = pl.BlockSpec((tile_b, out_pad), lambda i: (i, 0))

    # Advisory cost hint so XLA schedules the custom call tightly.
    flops = sum(2 * Bp * w.shape[0] * w.shape[1] for (w, _) in padded_params)
    bytes_accessed = (x2d.size * 4
                      + sum(w.size * 2 + b.size * 4 for (w, b) in padded_params)
                      + Bp * out_pad * 4)

    out_padded = pl.pallas_call(
        _make_mlp_kernel(num_layers),
        out_shape=jax.ShapeDtypeStruct((Bp, out_pad), jnp.float32),
        grid=grid,
        in_specs=in_specs,
        out_specs=out_spec,
        compiler_params=pltpu.CompilerParams(
            dimension_semantics=("parallel",)),        # megacore splits the batch
        cost_estimate=pl.CostEstimate(flops=flops, transcendentals=0,
                                      bytes_accessed=bytes_accessed),
    )(x2d, *flat_wb)

    out = out_padded[:B, :out_size]
    return out.reshape(*orig_shape[:-1], out_size)


# ----------------------------------------------------------------------------
# Parameter construction (matches nn.Linear default-init shapes / scaling)
# ----------------------------------------------------------------------------
def make_params(key, input_size, out_size, num_layers, hidden_size):
    input_sizes = [input_size] + [hidden_size] * (num_layers - 1)
    output_sizes = [hidden_size] * (num_layers - 1) + [out_size]
    params = []
    keys = jax.random.split(key, 2 * num_layers)
    for i, (ins, outs) in enumerate(zip(input_sizes, output_sizes)):
        scale = 1.0 / jnp.sqrt(ins)
        w = jax.random.uniform(keys[2 * i], (ins, outs), jnp.float32, -scale, scale)
        b = jax.random.uniform(keys[2 * i + 1], (outs,), jnp.float32, -scale, scale)
        params.append(dict(w=w, b=b))
    return params


# Pure-JAX f32 reference for the correctness check.
def _reference_forward(params, x):
    h = x
    for p in params[:-1]:
        h = jnp.maximum(h @ p["w"] + p["b"], 0.0)
    return h @ params[-1]["w"] + params[-1]["b"]


# ----------------------------------------------------------------------------
if __name__ == "__main__":
    input_size = 16
    out_size = 8
    num_layers = 3
    hidden_size = 32
    B = 2

    root = jax.random.PRNGKey(0)
    k_params, k_x = jax.random.split(root, 2)

    params = make_params(k_params, input_size, out_size, num_layers, hidden_size)
    x = jax.random.normal(k_x, (B, input_size), jnp.float32)

    # Pad/cast params ONCE, outside the forward hot path; pass them as jit arguments.
    padded = prepare_params(params)
    fwd = jax.jit(functools.partial(modnet_classifier_forward, out_size=out_size))

    out = fwd(padded, x)
    jax.block_until_ready(out)

    assert out.shape == (B, out_size)

    ref = _reference_forward(params, x)
    # bf16 MXU feeding -> relaxed tolerance (f32 accumulation keeps it tight).
    assert jnp.allclose(out, ref, atol=5e-2, rtol=5e-2), "mismatch vs. reference"

    print("KERNEL_OK")
</pallas_src>

<mosaic_0001>
module attributes {stable_mosaic.version = 11 : i64} {
  func.func @kernel(%arg0: i32, %arg1: memref<16x16xf32, #tpu.memory_space<vmem>>, %arg2: memref<16x128xbf16, #tpu.memory_space<vmem>>, %arg3: memref<1x128xf32, #tpu.memory_space<vmem>>, %arg4: memref<128x128xbf16, #tpu.memory_space<vmem>>, %arg5: memref<1x128xf32, #tpu.memory_space<vmem>>, %arg6: memref<128x128xbf16, #tpu.memory_space<vmem>>, %arg7: memref<1x128xf32, #tpu.memory_space<vmem>>, %arg8: memref<16x128xf32, #tpu.memory_space<vmem>>) attributes {dimension_semantics = [#tpu.dimension_semantics<parallel>], iteration_bounds = array<i64: 1>, scalar_prefetch = 0 : i64, scratch_operands = 0 : i64, tpu.core_type = #tpu.core_type<tc>, window_params = [{transform_indices = @transform_0, window_bounds = array<i64: 16, 16>}, {pipeline_mode = #tpu.pipeline_mode<synchronous>, transform_indices = @transform_1, window_bounds = array<i64: 16, 128>}, {pipeline_mode = #tpu.pipeline_mode<synchronous>, transform_indices = @transform_2, window_bounds = array<i64: 1, 128>}, {pipeline_mode = #tpu.pipeline_mode<synchronous>, transform_indices = @transform_3, window_bounds = array<i64: 128, 128>}, {pipeline_mode = #tpu.pipeline_mode<synchronous>, transform_indices = @transform_4, window_bounds = array<i64: 1, 128>}, {pipeline_mode = #tpu.pipeline_mode<synchronous>, transform_indices = @transform_5, window_bounds = array<i64: 128, 128>}, {pipeline_mode = #tpu.pipeline_mode<synchronous>, transform_indices = @transform_6, window_bounds = array<i64: 1, 128>}, {transform_indices = @transform_7, window_bounds = array<i64: 16, 128>}]} {
    %c0 = arith.constant 0 : index
    %c0_0 = arith.constant 0 : index
    %0 = vector.load %arg1[%c0, %c0_0] : memref<16x16xf32, #tpu.memory_space<vmem>>, vector<16x16xf32>
    %c0_1 = arith.constant 0 : index
    %c0_2 = arith.constant 0 : index
    %1 = vector.load %arg2[%c0_1, %c0_2] : memref<16x128xbf16, #tpu.memory_space<vmem>>, vector<16x128xbf16>
    %c0_3 = arith.constant 0 : index
    %c0_4 = arith.constant 0 : index
    %2 = vector.load %arg3[%c0_3, %c0_4] : memref<1x128xf32, #tpu.memory_space<vmem>>, vector<1x128xf32>
    %3 = arith.truncf %0 : vector<16x16xf32> to vector<16x16xbf16>
    %cst = arith.constant dense<0.000000e+00> : vector<16x128xf32>
    %4 = tpu.matmul %3, %1, %cst {dimension_numbers = #tpu.dot_dimension_numbers<[1], [0], [0], [1], [0, 0, 1, 1], [], []>} : vector<16x16xbf16>, vector<16x128xbf16>, vector<16x128xf32> -> vector<16x128xf32>
    %5 = vector.broadcast %2 : vector<1x128xf32> to vector<16x128xf32>
    %6 = arith.addf %4, %5 : vector<16x128xf32>
    %cst_5 = arith.constant 0.000000e+00 : f32
    %7 = vector.broadcast %cst_5 : f32 to vector<16x128xf32>
    %8 = arith.maximumf %6, %7 : vector<16x128xf32>
    %c0_6 = arith.constant 0 : index
    %c0_7 = arith.constant 0 : index
    %9 = vector.load %arg4[%c0_6, %c0_7] : memref<128x128xbf16, #tpu.memory_space<vmem>>, vector<128x128xbf16>
    %c0_8 = arith.constant 0 : index
    %c0_9 = arith.constant 0 : index
    %10 = vector.load %arg5[%c0_8, %c0_9] : memref<1x128xf32, #tpu.memory_space<vmem>>, vector<1x128xf32>
    %11 = arith.truncf %8 : vector<16x128xf32> to vector<16x128xbf16>
    %cst_10 = arith.constant dense<0.000000e+00> : vector<16x128xf32>
    %12 = tpu.matmul %11, %9, %cst_10 {dimension_numbers = #tpu.dot_dimension_numbers<[1], [0], [0], [1], [0, 0, 1, 1], [], []>} : vector<16x128xbf16>, vector<128x128xbf16>, vector<16x128xf32> -> vector<16x128xf32>
    %13 = vector.broadcast %10 : vector<1x128xf32> to vector<16x128xf32>
    %14 = arith.addf %12, %13 : vector<16x128xf32>
    %cst_11 = arith.constant 0.000000e+00 : f32
    %15 = vector.broadcast %cst_11 : f32 to vector<16x128xf32>
    %16 = arith.maximumf %14, %15 : vector<16x128xf32>
    %c0_12 = arith.constant 0 : index
    %c0_13 = arith.constant 0 : index
    %17 = vector.load %arg6[%c0_12, %c0_13] : memref<128x128xbf16, #tpu.memory_space<vmem>>, vector<128x128xbf16>
    %c0_14 = arith.constant 0 : index
    %c0_15 = arith.constant 0 : index
    %18 = vector.load %arg7[%c0_14, %c0_15] : memref<1x128xf32, #tpu.memory_space<vmem>>, vector<1x128xf32>
    %19 = arith.truncf %16 : vector<16x128xf32> to vector<16x128xbf16>
    %cst_16 = arith.constant dense<0.000000e+00> : vector<16x128xf32>
    %20 = tpu.matmul %19, %17, %cst_16 {dimension_numbers = #tpu.dot_dimension_numbers<[1], [0], [0], [1], [0, 0, 1, 1], [], []>} : vector<16x128xbf16>, vector<128x128xbf16>, vector<16x128xf32> -> vector<16x128xf32>
    %21 = vector.broadcast %18 : vector<1x128xf32> to vector<16x128xf32>
    %22 = arith.addf %20, %21 : vector<16x128xf32>
    %c0_17 = arith.constant 0 : index
    %c0_18 = arith.constant 0 : index
    %23 = vector.load %arg8[%c0_17, %c0_18] : memref<16x128xf32, #tpu.memory_space<vmem>>, vector<16x128xf32>
    tpu.vector_store %arg8[%c0_17, %c0_18], %22 {strides = array<i32>} : memref<16x128xf32, #tpu.memory_space<vmem>>, vector<16x128xf32>,
    return
  }
  func.func @transform_0(%arg0: i32) -> (i32, i32) {
    %c0_i32 = arith.constant 0 : i32
    %c0_i32_0 = arith.constant 0 : i32
    return %arg0, %c0_i32 : i32, i32
  }
  func.func @transform_1(%arg0: i32) -> (i32, i32) {
    %c0_i32 = arith.constant 0 : i32
    %c0_i32_0 = arith.constant 0 : i32
    %c0_i32_1 = arith.constant 0 : i32
    return %c0_i32, %c0_i32_0 : i32, i32
  }
  func.func @transform_2(%arg0: i32) -> (i32, i32) {
    %c0_i32 = arith.constant 0 : i32
    %c0_i32_0 = arith.constant 0 : i32
    %c0_i32_1 = arith.constant 0 : i32
    return %c0_i32, %c0_i32_0 : i32, i32
  }
  func.func @transform_3(%arg0: i32) -> (i32, i32) {
    %c0_i32 = arith.constant 0 : i32
    %c0_i32_0 = arith.constant 0 : i32
    %c0_i32_1 = arith.constant 0 : i32
    return %c0_i32, %c0_i32_0 : i32, i32
  }
  func.func @transform_4(%arg0: i32) -> (i32, i32) {
    %c0_i32 = arith.constant 0 : i32
    %c0_i32_0 = arith.constant 0 : i32
    %c0_i32_1 = arith.constant 0 : i32
    return %c0_i32, %c0_i32_0 : i32, i32
  }
  func.func @transform_5(%arg0: i32) -> (i32, i32) {
    %c0_i32 = arith.constant 0 : i32
    %c0_i32_0 = arith.constant 0 : i32
    %c0_i32_1 = arith.constant 0 : i32
    return %c0_i32, %c0_i32_0 : i32, i32
  }
  func.func @transform_6(%arg0: i32) -> (i32, i32) {
    %c0_i32 = arith.constant 0 : i32
    %c0_i32_0 = arith.constant 0 : i32
    %c0_i32_1 = arith.constant 0 : i32
    return %c0_i32, %c0_i32_0 : i32, i32
  }
  func.func @transform_7(%arg0: i32) -> (i32, i32) {
    %c0_i32 = arith.constant 0 : i32
    %c0_i32_0 = arith.constant 0 : i32
    return %arg0, %c0_i32 : i32, i32
  }
}

</mosaic_0001>

<llo_original>
// kernel: modnet_classifier_forward.1
$region0: #{modnet_classifier_forward.1}
  #allocation0 [shape = 'u32[]', space=smem, size = 0x4, offset = 0x4, fixed_abs, tag = 'smem constant byte address 0x4 - core index']
  #allocation1 [shape = 'u32[144,128]{1,0:T(1,128)}', space=vmem, size = 0x12000, scoped, tag = 'internal scratch']
  %s0 = inlined_call_operand.vmem [shape: f32[16,16], index: 0, kind: input, shape index: {}]
  %s1 = inlined_call_operand.vmem [shape: bf16[16,128], index: 1, kind: input, shape index: {}]
  %s2 = inlined_call_operand.vmem [shape: f32[1,128], index: 2, kind: input, shape index: {}]
  %s3 = inlined_call_operand.hbm [shape: bf16[128,128], index: 3, kind: input, shape index: {}]
  %s4 = inlined_call_operand.vmem [shape: f32[1,128], index: 4, kind: input, shape index: {}]
  %s5 = inlined_call_operand.hbm [shape: bf16[128,128], index: 5, kind: input, shape index: {}]
  %s6 = inlined_call_operand.vmem [shape: f32[1,128], index: 6, kind: input, shape index: {}]
  %s7 = inlined_call_operand.vmem [shape: f32[16,128], index: 7, kind: output, shape index: {}]
  %s8 = sld [smem:[#allocation0]]
  $region46: #{modnet_classifier_forward.1} parent=0
    _
  %s10 = ssub.s32 1, %s8
  %s11 = scalar_select 0, %s10, %s8
  $region1: #{modnet_classifier_forward.1} parent=0
    #allocation2 [shape = 'u8[32768]{0}', space=vmem, size = 0x8000, scoped, tag = 'input window, operand 3, single buffered']
    #allocation3 [shape = 's32[1]{0}', space=sflag, size = 0x4, scoped, tag = 'scoped memory for modnet_classifier_forward.1']
    #allocation4 [shape = 'u8[32768]{0}', space=vmem, size = 0x8000, scoped, tag = 'input window, operand 5, single buffered']
    #allocation5 [shape = 's32[1]{0}', space=sflag, size = 0x4, scoped, tag = 'scoped memory for modnet_classifier_forward.1']
    %12 = vsyncpa [#allocation3], 0
    %13 = vsyncpa [#allocation5], 0
    // Predicated region
    $region2: #{modnet_classifier_forward.1} parent=1 // pred_check
      _
    $region3: #{modnet_classifier_forward.1} parent=1 // pred_check_branch
      %15 = sbr.rel (0) target = $region5
    $region4: #{modnet_classifier_forward.1} parent=1 // pred_region
      _
    $region5: #{modnet_classifier_forward.1} parent=1 // pred_fallthru
      _
    // Predicated region
    $region6: #{modnet_classifier_forward.1} parent=1 // pred_check
      _
    $region7: #{modnet_classifier_forward.1} parent=1 // pred_check_branch
      %17 = sbr.rel (0) target = $region9
    $region8: #{modnet_classifier_forward.1} parent=1 // pred_region
      _
    $region9: #{modnet_classifier_forward.1} parent=1 // pred_fallthru
      _
    // Predicated region
    $region10: #{modnet_classifier_forward.1} parent=1 // pred_check
      _
    $region11: #{modnet_classifier_forward.1} parent=1 // pred_check_branch
      %19 = sbr.rel (0) target = $region13
    $region12: #{modnet_classifier_forward.1} parent=1 // pred_region
      _
    $region13: #{modnet_classifier_forward.1} parent=1 // pred_fallthru
      _
    // Predicated region
    $region14: #{modnet_classifier_forward.1} parent=1 // pred_check
      _
    $region15: #{modnet_classifier_forward.1} parent=1 // pred_check_branch
      %21 = sbr.rel (0) target = $region17
    $region16: #{modnet_classifier_forward.1} parent=1 // pred_region
      %s23 = ssub.s32 1024, 1024
      %24 = vsyncadd [#allocation3], %s23
      %s25 = sshll.u32 [#allocation2], 4
      %s26 = int_to_ptr.vmem [resolvable:$true] %s25
      %31 = dma.hbm_to_vmem [thread:$0]  %s3, 1024, %s26, [#allocation3], 64, 64, 4
    $region17: #{modnet_classifier_forward.1} parent=1 // pred_fallthru
      _
    // Predicated region
    $region18: #{modnet_classifier_forward.1} parent=1 // pred_check
      _
    $region19: #{modnet_classifier_forward.1} parent=1 // pred_check_branch
      %33 = sbr.rel (0) target = $region21
    $region20: #{modnet_classifier_forward.1} parent=1 // pred_region
      _
    $region21: #{modnet_classifier_forward.1} parent=1 // pred_fallthru
      _
    // Predicated region
    $region22: #{modnet_classifier_forward.1} parent=1 // pred_check
      _
    $region23: #{modnet_classifier_forward.1} parent=1 // pred_check_branch
      %35 = sbr.rel (0) target = $region25
    $region24: #{modnet_classifier_forward.1} parent=1 // pred_region
      %s37 = ssub.s32 1024, 1024
      %38 = vsyncadd [#allocation5], %s37
      %s39 = sshll.u32 [#allocation4], 4
      %s40 = int_to_ptr.vmem [resolvable:$true] %s39
      %45 = dma.hbm_to_vmem [thread:$0]  %s5, 1024, %s40, [#allocation5], 64, 64, 4
    $region25: #{modnet_classifier_forward.1} parent=1 // pred_fallthru
      _
    // Predicated region
    $region26: #{modnet_classifier_forward.1} parent=1 // pred_check
      _
    $region27: #{modnet_classifier_forward.1} parent=1 // pred_check_branch
      %47 = sbr.rel (0) target = $region29
    $region28: #{modnet_classifier_forward.1} parent=1 // pred_region
      _
    $region29: #{modnet_classifier_forward.1} parent=1 // pred_fallthru
      _
    // Predicated region
    $region30: #{modnet_classifier_forward.1} parent=1 // pred_check
      _
    $region31: #{modnet_classifier_forward.1} parent=1 // pred_check_branch
      %49 = sbr.rel (0) target = $region33
    $region32: #{modnet_classifier_forward.1} parent=1 // pred_region
      %50 = dma.done [#allocation3], 1024
    $region33: #{modnet_classifier_forward.1} parent=1 // pred_fallthru
      _
    // Predicated region
    $region34: #{modnet_classifier_forward.1} parent=1 // pred_check
      _
    $region35: #{modnet_classifier_forward.1} parent=1 // pred_check_branch
      %52 = sbr.rel (0) target = $region37
    $region36: #{modnet_classifier_forward.1} parent=1 // pred_region
      %53 = dma.done [#allocation5], 1024
    $region37: #{modnet_classifier_forward.1} parent=1 // pred_fallthru
      _
    %v55 = vld [vmem:[%s0] sm:$0xff]
    %v56 = vld [vmem:[%s0 + $0x8] sm:$0xff]
    %v57 = vld [vmem:[%s1] sm:$0xf]
    %v58 = vld [vmem:[%s1 + $0x4] sm:$0xf]
    %v59 = vld [vmem:[%s2] sm:$0x1]
    %v60 = vpack.c.bf16 %v56, %v55
    %v62 = vlaneseq
    %v63 = vshrl.u32 %v62, 7
    %v64 = vsub.s32 0, %v63
    %v65 = vrot.slane %v59, %v64
    %v69 = vunpack.c.l.b16 %v57
    %v70 = vunpack.c.l.b16 %v58
    %v71 = vpack.c.b16 %v70, %v69
    %vm73 = vcmask 130048
    %v75 = vsel %vm73, %v60, 0
    %77 = vmatprep.subr.bf16.mxu0 0
    %78 = vmatpush1.bf16.msra.mxu0 %v71
    %79 = vmatprep.subr.bf16.mxu0 0
    %80 = vmatpush1.bf16.msra.mxu0 0
    %81 = vmatprep.subr.bf16.mxu0 0
    %82 = vmatpush1.bf16.msra.mxu0 0
    %83 = vmatprep.subr.bf16.mxu0 0
    %84 = vmatpush1.bf16.msra.mxu0 0
    %85 = vmatprep.subr.bf16.mxu0 0
    %86 = vmatpush1.bf16.msra.mxu0 0
    %87 = vmatprep.subr.bf16.mxu0 0
    %88 = vmatpush1.bf16.msra.mxu0 0
    %89 = vmatprep.subr.bf16.mxu0 0
    %90 = vmatpush1.bf16.msra.mxu0 0
    %91 = vmatprep.subr.bf16.mxu0 0
    %92 = vmatpush1.bf16.msra.mxu0 0
    %93 = vmatprep.subr.bf16.mxu0 0
    %94 = vmatpush1.bf16.msra.mxu0 0
    %95 = vmatprep.subr.bf16.mxu0 0
    %96 = vmatpush1.bf16.msra.mxu0 0
    %97 = vmatprep.subr.bf16.mxu0 0
    %98 = vmatpush1.bf16.msra.mxu0 0
    %99 = vmatprep.subr.bf16.mxu0 0
    %100 = vmatpush1.bf16.msra.mxu0 0
    %101 = vmatprep.subr.bf16.mxu0 0
    %102 = vmatpush1.bf16.msra.mxu0 0
    %103 = vmatprep.subr.bf16.mxu0 0
    %104 = vmatpush1.bf16.msra.mxu0 0
    %105 = vmatprep.subr.bf16.mxu0 0
    %106 = vmatpush1.bf16.msra.mxu0 0
    %107 = vmatprep.subr.bf16.mxu0 0
    %108 = vmatpush1.bf16.msra.mxu0 0
    %109 = vmatprep.mubr.bf16.mxu0 0
    %110 = vmatmul.mubr.bf16.gmra.mrb[0].mxu0 %v75
    %v111 = vpop.f32.mrb[0].mxu0
    %v112 = vadd.f32 %v65, %v111
    %v113 = vpop.f32.mrb[0].mxu0
    %v114 = vpop.f32.mrb[0].mxu0
    %v115 = vadd.f32 %v65, %v114
    %v116 = vpop.f32.mrb[0].mxu0
    %117 = vdwg.mxu0
    %v118 = vmax.f32 %v112, 0.0
    %v119 = vmax.f32 %v115, 0.0
    %v120 = vld [vmem:[#allocation2] sm:$0xf]
    %v121 = vld [vmem:[#allocation2 + $0x4] sm:$0xf]
    %v122 = vld [vmem:[#allocation2 + $0x8] sm:$0xf]
    %v123 = vld [vmem:[#allocation2 + $0xc] sm:$0xf]
    %v124 = vld [vmem:[#allocation2 + $0x10] sm:$0xf]
    %v125 = vld [vmem:[#allocation2 + $0x14] sm:$0xf]
    %v126 = vld [vmem:[#allocation2 + $0x18] sm:$0xf]
    %v127 = vld [vmem:[#allocation2 + $0x1c] sm:$0xf]
    %v128 = vld [vmem:[#allocation2 + $0x20] sm:$0xf]
    %v129 = vld [vmem:[#allocation2 + $0x24] sm:$0xf]
    %v130 = vld [vmem:[#allocation2 + $0x28] sm:$0xf]
    %v131 = vld [vmem:[#allocation2 + $0x2c] sm:$0xf]
    %v132 = vld [vmem:[#allocation2 + $0x30] sm:$0xf]
    %v133 = vld [vmem:[#allocation2 + $0x34] sm:$0xf]
    %v134 = vld [vmem:[#allocation2 + $0x38] sm:$0xf]
    %v135 = vld [vmem:[#allocation2 + $0x3c] sm:$0xf]
    %v136 = vld [vmem:[%s4] sm:$0x1]
    %v137 = vpack.c.bf16 %v119, %v118
    %v139 = vlaneseq
    %v140 = vshrl.u32 %v139, 7
    %v141 = vsub.s32 0, %v140
    %v142 = vrot.slane %v136, %v141
    %v160 = vunpack.c.l.b16 %v120
    %v161 = vunpack.c.l.b16 %v121
    %v162 = vunpack.c.l.b16 %v122
    %v163 = vunpack.c.l.b16 %v123
    %v164 = vunpack.c.l.b16 %v124
    %v165 = vunpack.c.l.b16 %v125
    %v166 = vunpack.c.l.b16 %v126
    %v167 = vunpack.c.l.b16 %v127
    %v168 = vunpack.c.l.b16 %v128
    %v169 = vunpack.c.l.b16 %v129
    %v170 = vunpack.c.l.b16 %v130
    %v171 = vunpack.c.l.b16 %v131
    %v172 = vunpack.c.l.b16 %v132
    %v173 = vunpack.c.l.b16 %v133
    %v174 = vunpack.c.l.b16 %v134
    %v175 = vunpack.c.l.b16 %v135
    %v176 = vpack.c.b16 %v161, %v160
    %v177 = vpack.c.b16 %v163, %v162
    %v178 = vpack.c.b16 %v165, %v164
    %v179 = vpack.c.b16 %v167, %v166
    %v180 = vpack.c.b16 %v169, %v168
    %v181 = vpack.c.b16 %v171, %v170
    %v182 = vpack.c.b16 %v173, %v172
    %v183 = vpack.c.b16 %v175, %v174
    %192 = vmatprep.subr.bf16.mxu0 0
    %193 = vmatpush1.bf16.msra.mxu0 %v176
    %194 = vmatprep.subr.bf16.mxu0 0
    %195 = vmatpush1.bf16.msra.mxu0 %v177
    %196 = vmatprep.subr.bf16.mxu0 0
    %197 = vmatpush1.bf16.msra.mxu0 %v178
    %198 = vmatprep.subr.bf16.mxu0 0
    %199 = vmatpush1.bf16.msra.mxu0 %v179
    %200 = vmatprep.subr.bf16.mxu0 0
    %201 = vmatpush1.bf16.msra.mxu0 %v180
    %202 = vmatprep.subr.bf16.mxu0 0
    %203 = vmatpush1.bf16.msra.mxu0 %v181
    %204 = vmatprep.subr.bf16.mxu0 0
    %205 = vmatpush1.bf16.msra.mxu0 %v182
    %206 = vmatprep.subr.bf16.mxu0 0
    %207 = vmatpush1.bf16.msra.mxu0 %v183
    %208 = vmatprep.subr.bf16.mxu0 0
    %209 = vmatpush1.bf16.msra.mxu0 0
    %210 = vmatprep.subr.bf16.mxu0 0
    %211 = vmatpush1.bf16.msra.mxu0 0
    %212 = vmatprep.subr.bf16.mxu0 0
    %213 = vmatpush1.bf16.msra.mxu0 0
    %214 = vmatprep.subr.bf16.mxu0 0
    %215 = vmatpush1.bf16.msra.mxu0 0
    %216 = vmatprep.subr.bf16.mxu0 0
    %217 = vmatpush1.bf16.msra.mxu0 0
    %218 = vmatprep.subr.bf16.mxu0 0
    %219 = vmatpush1.bf16.msra.mxu0 0
    %220 = vmatprep.subr.bf16.mxu0 0
    %221 = vmatpush1.bf16.msra.mxu0 0
    %222 = vmatprep.subr.bf16.mxu0 0
    %223 = vmatpush1.bf16.msra.mxu0 0
    %224 = vmatprep.mubr.bf16.mxu0 0
    %225 = vmatmul.mubr.bf16.gmra.mrb[0].mxu0 %v137
    %v226 = vpop.f32.mrb[0].mxu0
    %v227 = vadd.f32 %v142, %v226
    %v228 = vpop.f32.mrb[0].mxu0
    %v229 = vpop.f32.mrb[0].mxu0
    %v230 = vadd.f32 %v142, %v229
    %v231 = vpop.f32.mrb[0].mxu0
    %232 = vdwg.mxu0
    %v233 = vmax.f32 %v227, 0.0
    %v234 = vmax.f32 %v230, 0.0
    %v235 = vld [vmem:[#allocation4] sm:$0xf]
    %v236 = vld [vmem:[#allocation4 + $0x4] sm:$0xf]
    %v237 = vld [vmem:[#allocation4 + $0x8] sm:$0xf]
    %v238 = vld [vmem:[#allocation4 + $0xc] sm:$0xf]
    %v239 = vld [vmem:[#allocation4 + $0x10] sm:$0xf]
    %v240 = vld [vmem:[#allocation4 + $0x14] sm:$0xf]
    %v241 = vld [vmem:[#allocation4 + $0x18] sm:$0xf]
    %v242 = vld [vmem:[#allocation4 + $0x1c] sm:$0xf]
    %v243 = vld [vmem:[#allocation4 + $0x20] sm:$0xf]
    %v244 = vld [vmem:[#allocation4 + $0x24] sm:$0xf]
    %v245 = vld [vmem:[#allocation4 + $0x28] sm:$0xf]
    %v246 = vld [vmem:[#allocation4 + $0x2c] sm:$0xf]
    %v247 = vld [vmem:[#allocation4 + $0x30] sm:$0xf]
    %v248 = vld [vmem:[#allocation4 + $0x34] sm:$0xf]
    %v249 = vld [vmem:[#allocation4 + $0x38] sm:$0xf]
    %v250 = vld [vmem:[#allocation4 + $0x3c] sm:$0xf]
    %v251 = vld [vmem:[%s6] sm:$0x1]
    %v252 = vpack.c.bf16 %v234, %v233
    %v254 = vlaneseq
    %v255 = vshrl.u32 %v254, 7
    %v256 = vsub.s32 0, %v255
    %v257 = vrot.slane %v251, %v256
    %v275 = vunpack.c.l.b16 %v235
    %v276 = vunpack.c.l.b16 %v236
    %v277 = vunpack.c.l.b16 %v237
    %v278 = vunpack.c.l.b16 %v238
    %v279 = vunpack.c.l.b16 %v239
    %v280 = vunpack.c.l.b16 %v240
    %v281 = vunpack.c.l.b16 %v241
    %v282 = vunpack.c.l.b16 %v242
    %v283 = vunpack.c.l.b16 %v243
    %v284 = vunpack.c.l.b16 %v244
    %v285 = vunpack.c.l.b16 %v245
    %v286 = vunpack.c.l.b16 %v246
    %v287 = vunpack.c.l.b16 %v247
    %v288 = vunpack.c.l.b16 %v248
    %v289 = vunpack.c.l.b16 %v249
    %v290 = vunpack.c.l.b16 %v250
    %v291 = vpack.c.b16 %v276, %v275
    %v292 = vpack.c.b16 %v278, %v277
    %v293 = vpack.c.b16 %v280, %v279
    %v294 = vpack.c.b16 %v282, %v281
    %v295 = vpack.c.b16 %v284, %v283
    %v296 = vpack.c.b16 %v286, %v285
    %v297 = vpack.c.b16 %v288, %v287
    %v298 = vpack.c.b16 %v290, %v289
    %307 = vmatprep.subr.bf16.mxu0 0
    %308 = vmatpush1.bf16.msra.mxu0 %v291
    %309 = vmatprep.subr.bf16.mxu0 0
    %310 = vmatpush1.bf16.msra.mxu0 %v292
    %311 = vmatprep.subr.bf16.mxu0 0
    %312 = vmatpush1.bf16.msra.mxu0 %v293
    %313 = vmatprep.subr.bf16.mxu0 0
    %314 = vmatpush1.bf16.msra.mxu0 %v294
    %315 = vmatprep.subr.bf16.mxu0 0
    %316 = vmatpush1.bf16.msra.mxu0 %v295
    %317 = vmatprep.subr.bf16.mxu0 0
    %318 = vmatpush1.bf16.msra.mxu0 %v296
    %319 = vmatprep.subr.bf16.mxu0 0
    %320 = vmatpush1.bf16.msra.mxu0 %v297
    %321 = vmatprep.subr.bf16.mxu0 0
    %322 = vmatpush1.bf16.msra.mxu0 %v298
    %323 = vmatprep.subr.bf16.mxu0 0
    %324 = vmatpush1.bf16.msra.mxu0 0
    %325 = vmatprep.subr.bf16.mxu0 0
    %326 = vmatpush1.bf16.msra.mxu0 0
    %327 = vmatprep.subr.bf16.mxu0 0
    %328 = vmatpush1.bf16.msra.mxu0 0
    %329 = vmatprep.subr.bf16.mxu0 0
    %330 = vmatpush1.bf16.msra.mxu0 0
    %331 = vmatprep.subr.bf16.mxu0 0
    %332 = vmatpush1.bf16.msra.mxu0 0
    %333 = vmatprep.subr.bf16.mxu0 0
    %334 = vmatpush1.bf16.msra.mxu0 0
    %335 = vmatprep.subr.bf16.mxu0 0
    %336 = vmatpush1.bf16.msra.mxu0 0
    %337 = vmatprep.subr.bf16.mxu0 0
    %338 = vmatpush1.bf16.msra.mxu0 0
    %339 = vmatprep.mubr.bf16.mxu0 0
    %340 = vmatmul.mubr.bf16.gmra.mrb[0].mxu0 %v252
    %v341 = vpop.f32.mrb[0].mxu0
    %v342 = vadd.f32 %v257, %v341
    %v343 = vpop.f32.mrb[0].mxu0
    %v344 = vpop.f32.mrb[0].mxu0
    %v345 = vadd.f32 %v257, %v344
    %v346 = vpop.f32.mrb[0].mxu0
    %347 = vdwg.mxu0
    %348 = vst [vmem:[%s7] sm:$0xff] %v342
    %349 = vst [vmem:[%s7 + $0x8] sm:$0xff] %v345
    // Predicated region
    $region38: #{modnet_classifier_forward.1} parent=1 // pred_check
      _
    $region39: #{modnet_classifier_forward.1} parent=1 // pred_check_branch
      %351 = sbr.rel (0) target = $region41
    $region40: #{modnet_classifier_forward.1} parent=1 // pred_region
      _
    $region41: #{modnet_classifier_forward.1} parent=1 // pred_fallthru
      _
    // Predicated region
    $region42: #{modnet_classifier_forward.1} parent=1 // pred_check
      _
    $region43: #{modnet_classifier_forward.1} parent=1 // pred_check_branch
      %353 = sbr.rel (0) target = $region45
    $region44: #{modnet_classifier_forward.1} parent=1 // pred_region
      _
    $region45: #{modnet_classifier_forward.1} parent=1 // pred_fallthru
      _
    %354 = vsyncpa [#allocation3], 1
    %355 = vsyncpa [#allocation5], 1

</llo_original>
